<compile_context>
chip_gen: v6e
topology: v6e:2x2x1
jax: 0.10.0
libtpu: 0.0.40
codegen_flags: <defaults>
</compile_context>

<pallas_src>
import jax
import jax.numpy as jnp
from jax.experimental import pallas as pl
from jax.experimental.pallas import tpu as pltpu


def _copy_kernel(x_ref, o_ref):
    # Input and output blocks have identical shapes; this is a plain tile
    # copy.  Partial trailing tiles are handled by Pallas OOB-padded reads
    # and masked stores.
    o_ref[...] = x_ref[...]


def _sublane_multiple(dtype) -> int:
    itemsize = jnp.dtype(dtype).itemsize
    if itemsize >= 4:
        return 8
    if itemsize == 2:
        return 16
    return 32


def _round_up(x: int, m: int) -> int:
    return ((x + m - 1) // m) * m


def _cdiv(a: int, b: int) -> int:
    return -(-a // b)


def chomp1d(x: jax.Array, chomp_size: int) -> jax.Array:
    """Pallas TPU Chomp1d: (N, C, L) -> (N, C, L - chomp_size), same dtype."""
    assert chomp_size > 0, "chomp_size must be positive (Chomp1d uses padding > 0)"
    n, c, l = x.shape
    l_out = l - chomp_size
    assert l_out > 0, "chomp_size must be smaller than the time dimension"

    rows = n * c
    itemsize = jnp.dtype(x.dtype).itemsize

    # Tiny-tensor / short-time fallback: a sub-128 lane output would lower to
    # masked vst.msk stores and launch overhead dominates; let XLA slice it.
    if l_out < 128 or rows * l_out * itemsize < (64 << 10):
        return x[:, :, :l_out]

    x2 = x.reshape(rows, l)  # free, contiguous reshape

    sub = _sublane_multiple(x.dtype)

    # --- lane (time) tile: byte-constant ~8 KiB per row, multiple of 128 ---
    tl_cap = max(128, ((8192 // itemsize) // 128) * 128)  # 2048 f32 / 4096 bf16 / 8192 i8
    ntt = _cdiv(l_out, tl_cap)
    tl = _round_up(_cdiv(l_out, ntt), 128)          # balanced, 128-multiple

    # --- sublane (row) tile: target ~4 MiB per block, sublane-aligned -------
    target_block_bytes = 4 << 20
    tr_cap = max(sub, ((target_block_bytes // (tl * itemsize)) // sub) * sub)
    if rows <= tr_cap:
        tr = rows                                    # equals full dim -> always legal
    else:
        nrt = _cdiv(rows, tr_cap)
        tr = _round_up(_cdiv(rows, nrt), sub)        # balanced, sublane-aligned

    nr = _cdiv(rows, tr)
    nt = _cdiv(l_out, tl)

    # --- grid ordering: axis with more steps first (v7x megacore sharding) --
    if nt >= nr:
        grid = (nt, nr)
        in_specs = [pl.BlockSpec((tr, tl), lambda j, i: (i, j))]
        out_specs = pl.BlockSpec((tr, tl), lambda j, i: (i, j))
    else:
        grid = (nr, nt)
        in_specs = [pl.BlockSpec((tr, tl), lambda i, j: (i, j))]
        out_specs = pl.BlockSpec((tr, tl), lambda i, j: (i, j))

    # --- VMEM budget: 2 in + 2 out double-buffered blocks + slack -----------
    block_bytes = tr * tl * itemsize
    vmem_limit = min(max(32 << 20, 4 * block_bytes + (4 << 20)), 56 << 20)

    bytes_accessed = 2 * rows * l_out * itemsize
    cost = pl.CostEstimate(flops=0, transcendentals=0, bytes_accessed=bytes_accessed)

    out2 = pl.pallas_call(
        _copy_kernel,
        out_shape=jax.ShapeDtypeStruct((rows, l_out), x.dtype),
        grid_spec=pltpu.PrefetchScalarGridSpec(
            num_scalar_prefetch=0,
            grid=grid,
            in_specs=in_specs,
            out_specs=out_specs,
        ),
        compiler_params=pltpu.CompilerParams(
            dimension_semantics=("parallel", "parallel"),
            vmem_limit_bytes=vmem_limit,
        ),
        cost_estimate=cost,
    )(x2)

    return out2.reshape(n, c, l_out)


if __name__ == "__main__":
    key = jax.random.PRNGKey(0)

    # Case 1: small TCN-like shape (takes the plain-slice fast-exit path).
    N, C, L = 2, 4, 16
    chomp_size = 2
    x = jax.random.normal(key, (N, C, L), dtype=jnp.float32)
    out = jax.block_until_ready(chomp1d(x, chomp_size))
    ref = x[:, :, :-chomp_size]
    assert out.shape == (N, C, L - chomp_size), out.shape
    assert out.dtype == x.dtype
    assert jnp.array_equal(out, ref), "mismatch vs. reference slice (small case)"

    # Case 2: bf16, L >= 128 -> Pallas fast path (dtype-adaptive lane tile).
    N2, C2, L2, chomp2 = 2, 8, 256, 3
    x2 = jax.random.normal(jax.random.PRNGKey(0), (N2, C2, L2)).astype(jnp.bfloat16)
    out2 = jax.block_until_ready(chomp1d(x2, chomp2))
    ref2 = x2[:, :, :-chomp2]
    assert out2.shape == (N2, C2, L2 - chomp2), out2.shape
    assert out2.dtype == x2.dtype
    assert jnp.array_equal(out2, ref2), "mismatch vs. reference slice (bf16 tiled case)"

    # Case 3: partial trailing tiles -- rows not a sublane multiple, multiple
    # time tiles with l_out % tl != 0, small chomp so the final input block
    # over-reads into the chomped tail AND past L (OOB-padded read, masked
    # store).  Locks in the masked-store / OOB-pad behavior.
    N3, C3, L3, chomp3 = 3, 5, 2200, 57
    x3 = jax.random.normal(jax.random.PRNGKey(0), (N3, C3, L3), dtype=jnp.float32)
    out3 = jax.block_until_ready(chomp1d(x3, chomp3))
    ref3 = x3[:, :, :-chomp3]
    assert out3.shape == (N3, C3, L3 - chomp3), out3.shape
    assert out3.dtype == x3.dtype
    assert jnp.array_equal(out3, ref3), "mismatch vs. reference slice (partial-tile case)"

    print("KERNEL_OK")
</pallas_src>

<mosaic_0001>
module attributes {stable_mosaic.version = 11 : i64} {
  func.func @_copy_kernel(%arg0: i32, %arg1: i32, %arg2: memref<15x1152xf32, #tpu.memory_space<vmem>>, %arg3: memref<15x1152xf32, #tpu.memory_space<vmem>>) attributes {dimension_semantics = [#tpu.dimension_semantics<parallel>, #tpu.dimension_semantics<parallel>], iteration_bounds = array<i64: 2, 1>, scalar_prefetch = 0 : i64, scratch_operands = 0 : i64, tpu.core_type = #tpu.core_type<tc>, window_params = [{transform_indices = @transform_0, window_bounds = array<i64: 15, 1152>}, {transform_indices = @transform_1, window_bounds = array<i64: 15, 1152>}]} {
    %c0 = arith.constant 0 : index
    %c0_0 = arith.constant 0 : index
    %0 = vector.load %arg2[%c0, %c0_0] : memref<15x1152xf32, #tpu.memory_space<vmem>>, vector<15x1152xf32>
    %c0_1 = arith.constant 0 : index
    %c0_2 = arith.constant 0 : index
    %1 = vector.load %arg3[%c0_1, %c0_2] : memref<15x1152xf32, #tpu.memory_space<vmem>>, vector<15x1152xf32>
    tpu.vector_store %arg3[%c0_1, %c0_2], %0 {strides = array<i32>} : memref<15x1152xf32, #tpu.memory_space<vmem>>, vector<15x1152xf32>,
    return
  }
  func.func @transform_0(%arg0: i32, %arg1: i32) -> (i32, i32) {
    %c0_i32 = arith.constant 0 : i32
    return %arg1, %arg0 : i32, i32
  }
  func.func @transform_1(%arg0: i32, %arg1: i32) -> (i32, i32) {
    %c0_i32 = arith.constant 0 : i32
    return %arg1, %arg0 : i32, i32
  }
}

</mosaic_0001>

<llo_original>
// kernel: tpu_custom_call.1
$region0: #{tpu_custom_call.1}
  #allocation0 [shape = 'u32[]', space=smem, size = 0x4, offset = 0x4, fixed_abs, tag = 'smem constant byte address 0x4 - core index']
  #allocation1 [shape = 'u32[144,128]{1,0:T(1,128)}', space=vmem, size = 0x12000, scoped, tag = 'internal scratch']
  %s0 = inlined_call_operand.hbm [shape: f32[15,2200], index: 0, kind: input, shape index: {}]
  %s1 = inlined_call_operand.hbm [shape: f32[15,2143], index: 1, kind: output, shape index: {}]
  %s2 = sld [smem:[#allocation0]]
  $region41: #{tpu_custom_call.1} parent=0
    _
  %s4 = ssub.s32 1, %s2
  %s5 = scalar_select 0, %s4, %s2
  $region1: #{tpu_custom_call.1} parent=0
    #allocation2 [shape = 'u8[147456]{0}', space=vmem, size = 0x24000, scoped, tag = 'input window, operand 0']
    #allocation3 [shape = 's32[2]{0}', space=sflag, size = 0x8, scoped, tag = 'scoped memory for tpu_custom_call.1']
    #allocation4 [shape = 's32[2]{0}', space=sflag, size = 0x8, scoped, tag = 'scoped memory for tpu_custom_call.1']
    #allocation5 [shape = 'u8[147456]{0}', space=vmem, size = 0x24000, scoped, tag = 'output window, operand 0']
    %6 = vsyncpa [#allocation3], 0
    %s7 = scalar_lea.sflag [#allocation3], 1
    %8 = vsyncpa %s7, 0
    %9 = vsyncpa [#allocation4], 0
    %s10 = scalar_lea.sflag [#allocation4], 1
    %11 = vsyncpa %s10, 0
    loop: start=0, step=1, limit=4
    $region2: #{tpu_custom_call.1} parent=1 // loop_pre_header
      _
    $region3: #{tpu_custom_call.1} parent=1 // loop_header
      %s13 = sphi 0, %s17
      %p14 = scmp.ge.s32.totalorder %s13, 4
      %s20 = sphi 0, %s32
      %s21 = sphi 0, %s28
      %s22 = sphi 0, %s20
      %s23 = sphi 0, %s21
      %s24 = sphi 0, %s22
      %s25 = sphi 0, %s23
      %s37 = sphi 0, %s39
      %s40 = sphi 0, %s37
      %s41 = sphi 0, %s40
      %s57 = sphi 0, %s41
      %s65 = sphi 0, %s67
      %s68 = sphi 0, %s65
      %s69 = sphi 0, %s68
      %s85 = sphi 0, %s69
    $region4: #{tpu_custom_call.1} parent=1 // loop_header_branch
      %16 = sbr.rel (%p14) target = $region8
    $region5: #{tpu_custom_call.1} parent=1 // loop_body
      %s18 = ssub.s32 %s13, 1
      %s19 = ssub.s32 %s13, 2
      %s26 = sadd.s32 1, %s21
      %p27 = scmp.ge.s32.totalorder %s26, 1
      %s28 = scalar_select %p27, 0, %s26
      %s29 = sadd.s32 1, %s20
      %s30 = scalar_select %p27, %s29, %s20
      %p31 = scmp.ge.s32.totalorder %s30, 2
      %s32 = scalar_select %p31, 0, %s30
      %s33 = ssub.s32 %s21, %s28
      %s34 = ssub.s32 %s20, %s32
      %s35 = sor.u32 %s33, %s34
      %p36 = scmp.eq.s32.totalorder %s35, 0
      %s38 = sadd.s32 %s37, 1
      %s39 = scalar_select %p36, %s37, %s38
      %p42 = pneg %p36
      %p43 = scmp.eq.s32.totalorder %s13, 1
      %p44 = por %p42, %p43
      %p45 = scmp.ne.s32.totalorder %s37, %s40
      %p46 = scmp.eq.s32.totalorder %s13, 0
      %p47 = por %p45, %p46
      %p48 = scmp.ne.s32.totalorder %s37, %s40
      %p49 = scmp.eq.s32.totalorder %s18, 1
      %p50 = por %p48, %p49
      %p51 = scmp.ne.s32.totalorder %s40, %s41
      %p52 = scmp.eq.s32.totalorder %s18, 0
      %p53 = por %p51, %p52
      %p54 = scmp.ne.s32.totalorder %s40, %s41
      %p55 = scmp.eq.s32.totalorder %s19, 1
      %p56 = por %p54, %p55
      %p58 = scmp.ne.s32.totalorder %s41, %s57
      %p59 = scmp.eq.s32.totalorder %s19, 0
      %p60 = por %p58, %p59
      %s61 = ssub.s32 %s21, %s28
      %s62 = ssub.s32 %s20, %s32
      %s63 = sor.u32 %s61, %s62
      %p64 = scmp.eq.s32.totalorder %s63, 0
      %s66 = sadd.s32 %s65, 1
      %s67 = scalar_select %p64, %s65, %s66
      %p70 = pneg %p64
      %p71 = scmp.eq.s32.totalorder %s13, 1
      %p72 = por %p70, %p71
      %p73 = scmp.ne.s32.totalorder %s65, %s68
      %p74 = scmp.eq.s32.totalorder %s13, 0
      %p75 = por %p73, %p74
      %p76 = scmp.ne.s32.totalorder %s65, %s68
      %p77 = scmp.eq.s32.totalorder %s18, 1
      %p78 = por %p76, %p77
      %p79 = scmp.ne.s32.totalorder %s68, %s69
      %p80 = scmp.eq.s32.totalorder %s18, 0
      %p81 = por %p79, %p80
      %p82 = scmp.ne.s32.totalorder %s68, %s69
      %p83 = scmp.eq.s32.totalorder %s19, 1
      %p84 = por %p82, %p83
      %p86 = scmp.ne.s32.totalorder %s69, %s85
      %p87 = scmp.eq.s32.totalorder %s19, 0
      %p88 = por %p86, %p87
      %p89 = scmp.le.s32.totalorder 1, %s13
      %p90 = scmp.lt.s32.totalorder %s13, 3
      %p91 = pnand %p89, %p90
      %p92 = pneg %p91
      // Predicated region
      $region9: #{tpu_custom_call.1} parent=5 // pred_check
        _
      $region10: #{tpu_custom_call.1} parent=5 // pred_check_branch
        %94 = sbr.rel (%p91) target = $region12
      $region11: #{tpu_custom_call.1} parent=5 // pred_region
        %s95 = ssub.s32 %s13, 1
      $region12: #{tpu_custom_call.1} parent=5 // pred_fallthru
        _
      %p96 = scmp.lt.s32.totalorder %s13, 2
      // Predicated region
      $region13: #{tpu_custom_call.1} parent=5 // pred_check
        %p97 = pneg %p96
      $region14: #{tpu_custom_call.1} parent=5 // pred_check_branch
        %99 = sbr.rel (%p97) target = $region16
      $region15: #{tpu_custom_call.1} parent=5 // pred_region
        // Predicated region
        $region17: #{tpu_custom_call.1} parent=15 // pred_check
          %p100 = pneg %p47
        $region18: #{tpu_custom_call.1} parent=15 // pred_check_branch
          %102 = sbr.rel (%p100) target = $region20
        $region19: #{tpu_custom_call.1} parent=15 // pred_region
          %s103 = sand.u32 %s37, 1
          %s104 = scalar_lea.sflag [#allocation3], %s103
          %s105 = sand.u32 %s37, 1
          %s106 = smul.addr %s105, 144
          %s107 = scalar_lea.vmem [#allocation2], %s106
          %s108 = smul.u32 2, %s21
          %s109 = smul.u32 9, %s20
          %s111 = ssub.s32 2304, 2304
          %112 = vsyncadd %s104, %s111
          %s113 = smul.addr %s108, 18
          %s114 = sadd.s32 %s109, %s113
          %s115 = smul.addr %s114, 128
          %s116 = scalar_lea.hbm %s0, %s115
          %s117 = sshll.u32 %s107, 4
          %s118 = int_to_ptr.vmem [resolvable:$true] %s117
          %123 = dma.hbm_to_vmem [thread:$0]  %s116, 2304, %s118, %s104, 2304, 1152, 72
        $region20: #{tpu_custom_call.1} parent=15 // pred_fallthru
          _
      $region16: #{tpu_custom_call.1} parent=5 // pred_fallthru
        _
      %p124 = scmp.le.s32.totalorder 1, %s13
      %p125 = scmp.lt.s32.totalorder %s13, 3
      %p126 = pnand %p124, %p125
      %p127 = pneg %p126
      // Predicated region
      $region21: #{tpu_custom_call.1} parent=5 // pred_check
        _
      $region22: #{tpu_custom_call.1} parent=5 // pred_check_branch
        %129 = sbr.rel (%p126) target = $region24
      $region23: #{tpu_custom_call.1} parent=5 // pred_region
        %s130 = ssub.s32 %s13, 1
        %s131 = sand.u32 %s40, 1
        %s132 = scalar_lea.sflag [#allocation3], %s131
        %s133 = sand.u32 %s40, 1
        %s134 = smul.addr %s133, 144
        %s135 = scalar_lea.vmem [#allocation2], %s134
        // Predicated region
        $region25: #{tpu_custom_call.1} parent=23 // pred_check
          %p136 = pneg %p53
        $region26: #{tpu_custom_call.1} parent=23 // pred_check_branch
          %138 = sbr.rel (%p136) target = $region28
        $region27: #{tpu_custom_call.1} parent=23 // pred_region
          %139 = dma.done %s132, 2304
        $region28: #{tpu_custom_call.1} parent=23 // pred_fallthru
          _
        %s140 = sand.u32 %s40, 1
        %s141 = scalar_lea.sflag [#allocation3], %s140
        %s142 = sand.u32 %s40, 1
        %s143 = smul.addr %s142, 144
        %s144 = scalar_lea.vmem [#allocation2], %s143
        %p145 = pneg %p53
        %p146 = pneg %p50
        %p147 = pneg %p81
        %p148 = pneg %p78
        %s149 = sand.u32 %s68, 1
        %s150 = scalar_lea.sflag [#allocation4], %s149
        %s151 = sand.u32 %s68, 1
        %s152 = smul.addr %s151, 144
        %s153 = scalar_lea.vmem [#allocation5], %s152
        %s154 = smul.u32 2, %s23
        %s155 = smul.u32 9, %s22
        %s156 = smul.u32 2, %s23
        %s157 = smul.u32 9, %s22
        %s158 = ssub.s32 17, %s157
        %p159 = scmp.lt.s32.totalorder %s158, 9
        %s160 = scalar_select %p159, %s158, 9
        %s161 = smul.u32 256, %s160
        %v162 = vld [vmem:[%s135] sm:$0xff]
        %v163 = vld [vmem:[%s135 + $0x8] sm:$0xff]
        %v164 = vld [vmem:[%s135 + $0x10] sm:$0xff]
        %v165 = vld [vmem:[%s135 + $0x18] sm:$0xff]
        %v166 = vld [vmem:[%s135 + $0x20] sm:$0xff]
        %v167 = vld [vmem:[%s135 + $0x28] sm:$0xff]
        %v168 = vld [vmem:[%s135 + $0x30] sm:$0xff]
        %v169 = vld [vmem:[%s135 + $0x38] sm:$0xff]
        %v170 = vld [vmem:[%s135 + $0x40] sm:$0xff]
        %v171 = vld [vmem:[%s135 + $0x48] sm:$0x7f]
        %v172 = vld [vmem:[%s135 + $0x50] sm:$0x7f]
        %v173 = vld [vmem:[%s135 + $0x58] sm:$0x7f]
        %v174 = vld [vmem:[%s135 + $0x60] sm:$0x7f]
        %v175 = vld [vmem:[%s135 + $0x68] sm:$0x7f]
        %v176 = vld [vmem:[%s135 + $0x70] sm:$0x7f]
        %v177 = vld [vmem:[%s135 + $0x78] sm:$0x7f]
        %v178 = vld [vmem:[%s135 + $0x80] sm:$0x7f]
        %v179 = vld [vmem:[%s135 + $0x88] sm:$0x7f]
        %180 = vst [vmem:[%s153] sm:$0xff] %v162
        %181 = vst [vmem:[%s153 + $0x8] sm:$0xff] %v163
        %182 = vst [vmem:[%s153 + $0x10] sm:$0xff] %v164
        %183 = vst [vmem:[%s153 + $0x18] sm:$0xff] %v165
        %184 = vst [vmem:[%s153 + $0x20] sm:$0xff] %v166
        %185 = vst [vmem:[%s153 + $0x28] sm:$0xff] %v167
        %186 = vst [vmem:[%s153 + $0x30] sm:$0xff] %v168
        %187 = vst [vmem:[%s153 + $0x38] sm:$0xff] %v169
        %188 = vst [vmem:[%s153 + $0x40] sm:$0xff] %v170
        %189 = vst [vmem:[%s153 + $0x48] sm:$0x7f] %v171
        %190 = vst [vmem:[%s153 + $0x50] sm:$0x7f] %v172
        %191 = vst [vmem:[%s153 + $0x58] sm:$0x7f] %v173
        %192 = vst [vmem:[%s153 + $0x60] sm:$0x7f] %v174
        %193 = vst [vmem:[%s153 + $0x68] sm:$0x7f] %v175
        %194 = vst [vmem:[%s153 + $0x70] sm:$0x7f] %v176
        %195 = vst [vmem:[%s153 + $0x78] sm:$0x7f] %v177
        %196 = vst [vmem:[%s153 + $0x80] sm:$0x7f] %v178
        %197 = vst [vmem:[%s153 + $0x88] sm:$0x7f] %v179
        %s198 = sand.u32 %s68, 1
        %s199 = scalar_lea.sflag [#allocation4], %s198
        %s200 = sand.u32 %s68, 1
        %s201 = smul.addr %s200, 144
        %s202 = scalar_lea.vmem [#allocation5], %s201
        // Predicated region
        $region29: #{tpu_custom_call.1} parent=23 // pred_check
          %p203 = pneg %p78
        $region30: #{tpu_custom_call.1} parent=23 // pred_check_branch
          %205 = sbr.rel (%p203) target = $region32
        $region31: #{tpu_custom_call.1} parent=23 // pred_region
          %s206 = smul.u32 2, %s23
          %s207 = smul.u32 9, %s22
          %s208 = ssub.s32 17, %s207
          %p209 = scmp.lt.s32.totalorder %s208, 9
          %s210 = scalar_select %p209, %s208, 9
          %s211 = smul.u32 256, %s210
          %s213 = ssub.s32 2304, %s211
          %214 = vsyncadd %s199, %s213
          %p215 = scmp.ne.s32.totalorder 0, %s211
          %s216 = smul.addr %s206, 17
          %s217 = sadd.s32 %s207, %s216
          %s218 = smul.addr %s217, 128
          %s219 = scalar_lea.hbm %s1, %s218
          %s220 = smul.u32 %s210, 8
          %s221 = smul.u32 %s220, 2
          %s222 = sshll.u32 %s202, 4
          %s223 = int_to_ptr.vmem [resolvable:$true] %s222
          %s224 = sshll.u32 %s221, 4
          %228 = dma.vmem_to_hbm [thread:$0]  (%p215), %s223, %s224, %s219, %s199, 1152, 2176, %s220
        $region32: #{tpu_custom_call.1} parent=23 // pred_fallthru
          _
      $region24: #{tpu_custom_call.1} parent=5 // pred_fallthru
        _
      %p229 = scmp.le.s32.totalorder 2, %s13
      // Predicated region
      $region33: #{tpu_custom_call.1} parent=5 // pred_check
        %p230 = pneg %p229
      $region34: #{tpu_custom_call.1} parent=5 // pred_check_branch
        %232 = sbr.rel (%p230) target = $region36
      $region35: #{tpu_custom_call.1} parent=5 // pred_region
        %s233 = ssub.s32 %s13, 2
        // Predicated region
        $region37: #{tpu_custom_call.1} parent=35 // pred_check
          %p234 = pneg %p84
        $region38: #{tpu_custom_call.1} parent=35 // pred_check_branch
          %236 = sbr.rel (%p234) target = $region40
        $region39: #{tpu_custom_call.1} parent=35 // pred_region
          %s237 = sand.u32 %s69, 1
          %s238 = scalar_lea.sflag [#allocation4], %s237
          %s239 = sand.u32 %s69, 1
          %s240 = smul.addr %s239, 144
          %s241 = scalar_lea.vmem [#allocation5], %s240
          %242 = dma.done %s238, 2304
        $region40: #{tpu_custom_call.1} parent=35 // pred_fallthru
          _
      $region36: #{tpu_custom_call.1} parent=5 // pred_fallthru
        _
    $region6: #{tpu_custom_call.1} parent=1 // loop_footer
      %s17 = sadd.s32 1, %s13
    $region7: #{tpu_custom_call.1} parent=1 // loop_footer_branch
      %12 = sbr.rel target = $region3
    $region8: #{tpu_custom_call.1} parent=1 // loop_exit
      _
    %243 = vsyncpa [#allocation3], 1
    %s244 = scalar_lea.sflag [#allocation3], 1
    %245 = vsyncpa %s244, 1
    %246 = vsyncpa [#allocation4], 1
    %s247 = scalar_lea.sflag [#allocation4], 1
    %248 = vsyncpa %s247, 1

</llo_original>
